<compile_context>
chip_gen: v7x
topology: tpu7x:2x2x1
jax: 0.10.0
libtpu: 0.0.40
codegen_flags: <defaults>
</compile_context>

<pallas_src>
import functools

import jax
import jax.numpy as jnp
from jax import lax
from jax.experimental import pallas as pl
from jax.experimental.pallas import tpu as pltpu


# -----------------------------------------------------------------------------
# Kernels
# -----------------------------------------------------------------------------

def _layernorm_epilogue(y, g, beta, eps):
    """LayerNorm over the lane (hidden) axis of a f32 [bt, H] tile."""
    mean = jnp.mean(y, axis=-1, keepdims=True)
    mean_sq = jnp.mean(y * y, axis=-1, keepdims=True)
    # maximum() is on a [bt, 1] tensor (per-row, not per-element) -> ~free, and
    # it guards the single-pass E[y^2]-E[y]^2 cancellation from going negative.
    var = jnp.maximum(mean_sq - mean * mean, 0.0)
    inv = lax.rsqrt(var + eps)                      # EUP slot, effectively free
    return (y - mean) * inv * g + beta


def _self_output_kernel(x_ref, w_ref, b_ref, res_ref, g_ref, beta_ref, o_ref, *,
                        eps):
    """Resident-weight path: whole [H, H] W^T stays in VMEM; grid tiles tokens."""
    # In-kernel cast of the activation to the MXU operand dtype (bf16 default);
    # the residual keeps its original precision (it never feeds the MXU).
    x = x_ref[...].astype(w_ref.dtype)
    acc = jnp.dot(x, w_ref[...], preferred_element_type=jnp.float32)

    # f32 epilogue.  bias / gamma / beta are guaranteed f32 by the wrapper.
    y = acc + res_ref[...].astype(jnp.float32) + b_ref[...]
    out = _layernorm_epilogue(y, g_ref[...], beta_ref[...], eps)
    # NOTE: when T % bt != 0 the padded rows compute garbage stats; the padded
    # output rows are masked by Pallas, so this is harmless (row-wise op only).
    o_ref[...] = out.astype(o_ref.dtype)


def _self_output_kernel_ktiled(x_ref, w_ref, b_ref, res_ref, g_ref, beta_ref,
                               o_ref, acc_ref, *, eps):
    """K-tiled path (large H): grid = (token tiles, K tiles), f32 accumulator."""
    k = pl.program_id(1)

    @pl.when(k == 0)
    def _():
        acc_ref[...] = jnp.zeros_like(acc_ref)

    x = x_ref[...].astype(w_ref.dtype)
    acc_ref[...] += jnp.dot(x, w_ref[...], preferred_element_type=jnp.float32)

    @pl.when(k == pl.num_programs(1) - 1)
    def _():
        y = acc_ref[...] + res_ref[...].astype(jnp.float32) + b_ref[...]
        out = _layernorm_epilogue(y, g_ref[...], beta_ref[...], eps)
        o_ref[...] = out.astype(o_ref.dtype)


# -----------------------------------------------------------------------------
# Parameter prep (one-time; do NOT redo per forward)
# -----------------------------------------------------------------------------

def prepare_self_output_params(weight, bias, ln_gamma, ln_beta, *,
                               matmul_dtype=jnp.bfloat16):
    """Transpose the PyTorch [out, in] dense weight to [in, out], cast it to the
    MXU operand dtype (bf16 for production; f32 for validation only), and
    reshape the 1-D vectors to lane-dense [1, H] f32 tiles."""
    H_out, H_in = weight.shape
    w_t = jnp.asarray(weight).T.astype(matmul_dtype)            # [H_in, H_out]
    b2 = jnp.asarray(bias, jnp.float32).reshape(1, H_out)
    g2 = jnp.asarray(ln_gamma, jnp.float32).reshape(1, H_out)
    beta2 = jnp.asarray(ln_beta, jnp.float32).reshape(1, H_out)
    return w_t, b2, g2, beta2


# -----------------------------------------------------------------------------
# Tiling / VMEM heuristics
# -----------------------------------------------------------------------------

def _vmem_budget_bytes():
    """Generation-aware VMEM budget: leave headroom for compiler scratch."""
    try:
        cap = int(pltpu.get_tpu_info().vmem_capacity_bytes)
    except Exception:
        return 48 * 1024 * 1024                       # conservative fallback
    if cap <= 64 * 1024 * 1024:                       # v7x: 64 MiB per TC
        return max(cap - 16 * 1024 * 1024, 32 * 1024 * 1024)
    return min(96 * 1024 * 1024, cap - 32 * 1024 * 1024)   # v5e / v6e: 128 MiB


def _working_set_bytes(bt, H, tk, x_it, res_it, out_it, w_it, ktiled):
    # Streaming tiles are double-buffered by the Pallas pipeline.
    stream = 2 * bt * ((tk if ktiled else H) * x_it + H * (res_it + out_it))
    if ktiled:
        # Weight K-tiles change per grid step -> default double buffering;
        # plus the f32 accumulator scratch; tiny vectors single-buffered.
        const = 2 * tk * H * w_it + bt * H * 4 + 3 * H * 4
    else:
        # Resident weight + vectors are Buffered(1): one copy each.
        const = H * H * w_it + 3 * H * 4
    return stream + const


def _choose_block_tokens(T, requested, fits):
    """Largest MXU-friendly token tile that fits the VMEM budget."""
    if T <= 128:
        return T                          # block == full token axis (always legal)
    cands = []
    if requested:
        cands.append(int(requested))
    cands += [1024, 512, 256, 128]
    for c in cands:
        bt = min(c, T)
        if bt >= 256:
            bt = (bt // 256) * 256        # fill v6e/v7x 2x256x256 MXUs
        elif bt >= 128:
            bt = 128
        else:
            bt = max(8, (bt // 8) * 8)
        if fits(bt):
            return bt
    return 128


# -----------------------------------------------------------------------------
# Wrapper
# -----------------------------------------------------------------------------

def xlm_roberta_self_output(hidden_states, input_tensor, w_t, bias2, gamma2,
                            beta2, *, eps=1e-5, block_tokens=None,
                            out_dtype=None, weight_k_tile=None):
    """hidden_states, input_tensor: [T, H] (T = batch*seq), any float dtype.
    w_t: [H_in, H_out] pre-transposed weight (prepare_self_output_params).
    bias2 / gamma2 / beta2: [1, H] f32.  out_dtype: pass jnp.bfloat16 for bf16
    models to cut the output HBM stream."""
    T, H = hidden_states.shape
    assert input_tensor.shape == (T, H)
    assert w_t.shape == (H, H)

    out_dtype = out_dtype or hidden_states.dtype
    # No-op casts if prepare_self_output_params was used (already f32 / [1,H]).
    bias2 = bias2.astype(jnp.float32).reshape(1, H)
    gamma2 = gamma2.astype(jnp.float32).reshape(1, H)
    beta2 = beta2.astype(jnp.float32).reshape(1, H)

    x_it = hidden_states.dtype.itemsize
    res_it = input_tensor.dtype.itemsize
    out_it = jnp.dtype(out_dtype).itemsize
    w_it = w_t.dtype.itemsize

    budget = _vmem_budget_bytes()

    # Keep the full [H, H] weight VMEM-resident when it fits the budget with at
    # least a minimal (128-row) token tile; otherwise K-tile the reduction dim.
    resident_ok = _working_set_bytes(min(T, 128), H, H, x_it, res_it, out_it,
                                     w_it, False) <= budget
    if weight_k_tile is not None:
        tk = int(weight_k_tile)
        ktiled = tk < H
        if ktiled:
            assert H % tk == 0, "weight_k_tile must divide the hidden size"
    elif resident_ok:
        ktiled, tk = False, H
    else:
        tk = next((c for c in (512, 256, 128) if H % c == 0), H)
        ktiled = tk < H

    fits = lambda bt: _working_set_bytes(bt, H, tk, x_it, res_it, out_it,
                                         w_it, ktiled) <= budget
    bt = _choose_block_tokens(T, block_tokens, fits)

    need = _working_set_bytes(bt, H, tk, x_it, res_it, out_it, w_it, ktiled)
    vmem_limit = int(min(max(need * 3 // 2, 32 * 1024 * 1024), budget))

    cost = pl.CostEstimate(
        flops=2 * T * H * H,
        transcendentals=T,                          # one rsqrt per row
        bytes_accessed=(T * H * (x_it + res_it + out_it)
                        + H * H * w_it + 3 * H * 4),
    )

    const_mode = pl.Buffered(1)       # fetched once -> no wasted double buffer

    if not ktiled:
        grid = (pl.cdiv(T, bt),)
        kernel = functools.partial(_self_output_kernel, eps=eps)
        in_specs = [
            pl.BlockSpec((bt, H), lambda i: (i, 0)),                      # x tile
            pl.BlockSpec((H, H), lambda i: (0, 0), pipeline_mode=const_mode),   # W^T
            pl.BlockSpec((1, H), lambda i: (0, 0), pipeline_mode=const_mode),   # bias
            pl.BlockSpec((bt, H), lambda i: (i, 0)),                      # residual
            pl.BlockSpec((1, H), lambda i: (0, 0), pipeline_mode=const_mode),   # gamma
            pl.BlockSpec((1, H), lambda i: (0, 0), pipeline_mode=const_mode),   # beta
        ]
        out_specs = pl.BlockSpec((bt, H), lambda i: (i, 0))
        scratch = []
        dims = ("parallel",)
    else:
        grid = (pl.cdiv(T, bt), H // tk)            # reduction axis last
        kernel = functools.partial(_self_output_kernel_ktiled, eps=eps)
        in_specs = [
            pl.BlockSpec((bt, tk), lambda i, k: (i, k)),                  # x tile
            pl.BlockSpec((tk, H), lambda i, k: (k, 0)),                   # W^T K-tile
            pl.BlockSpec((1, H), lambda i, k: (0, 0), pipeline_mode=const_mode),
            pl.BlockSpec((bt, H), lambda i, k: (i, 0)),                   # residual
            pl.BlockSpec((1, H), lambda i, k: (0, 0), pipeline_mode=const_mode),
            pl.BlockSpec((1, H), lambda i, k: (0, 0), pipeline_mode=const_mode),
        ]
        out_specs = pl.BlockSpec((bt, H), lambda i, k: (i, 0))
        scratch = [pltpu.VMEM((bt, H), jnp.float32)]
        dims = ("parallel", "arbitrary")

    return pl.pallas_call(
        kernel,
        out_shape=jax.ShapeDtypeStruct((T, H), out_dtype),
        grid_spec=pltpu.PrefetchScalarGridSpec(
            num_scalar_prefetch=0,
            grid=grid,
            in_specs=in_specs,
            out_specs=out_specs,
            scratch_shapes=scratch,
        ),
        compiler_params=pltpu.CompilerParams(
            dimension_semantics=dims,
            vmem_limit_bytes=vmem_limit),
        cost_estimate=cost,
    )(hidden_states, w_t, bias2, input_tensor, gamma2, beta2)


# -----------------------------------------------------------------------------
# Pure-JAX reference + test
# -----------------------------------------------------------------------------

def _reference(hidden_states, input_tensor, weight, bias, g, b, eps):
    h = jnp.matmul(hidden_states, weight.T, precision="highest") + bias
    y = h + input_tensor
    mean = jnp.mean(y, axis=-1, keepdims=True)
    var = jnp.mean((y - mean) ** 2, axis=-1, keepdims=True)
    return (y - mean) / jnp.sqrt(var + eps) * g + b


if __name__ == "__main__":
    # Small shapes consistent with the module: batch=2, seq=8, hidden=256
    batch, seq, hidden = 2, 8, 256
    eps = 1e-5

    key = jax.random.PRNGKey(0)
    k1, k2, k3, k4, k5, k6 = jax.random.split(key, 6)

    hidden_states = jax.random.normal(k1, (batch, seq, hidden), jnp.float32)
    input_tensor = jax.random.normal(k2, (batch, seq, hidden), jnp.float32)

    # Deterministic synthetic parameters (no checkpoint load).
    weight = jax.random.normal(k3, (hidden, hidden), jnp.float32) * 0.02  # [out, in]
    bias = jax.random.normal(k4, (hidden,), jnp.float32) * 0.02
    ln_gamma = 1.0 + 0.1 * jax.random.normal(k5, (hidden,), jnp.float32)
    ln_beta = 0.1 * jax.random.normal(k6, (hidden,), jnp.float32)

    x2d = hidden_states.reshape(batch * seq, hidden)
    r2d = input_tensor.reshape(batch * seq, hidden)

    ref = _reference(hidden_states, input_tensor, weight, bias,
                     ln_gamma, ln_beta, eps)

    # 1) f32-operand path (validation only): numerically faithful, tight tol.
    params_f32 = prepare_self_output_params(weight, bias, ln_gamma, ln_beta,
                                            matmul_dtype=jnp.float32)
    run_f32 = jax.jit(functools.partial(xlm_roberta_self_output, eps=eps))
    out_f32 = run_f32(x2d, r2d, *params_f32).reshape(batch, seq, hidden)
    jax.block_until_ready(out_f32)
    assert jnp.allclose(out_f32, ref, atol=1e-3, rtol=1e-3), "f32 path mismatch"

    # 2) bf16-operand production path: bf16 MXU operands via in-kernel cast,
    #    f32 accumulation + f32 LayerNorm epilogue; looser tolerance.
    params_bf16 = prepare_self_output_params(weight, bias, ln_gamma, ln_beta)
    run_bf16 = jax.jit(functools.partial(xlm_roberta_self_output, eps=eps))
    out_bf16 = run_bf16(x2d, r2d, *params_bf16).reshape(batch, seq, hidden)
    jax.block_until_ready(out_bf16)
    assert jnp.allclose(out_bf16, ref, atol=3e-2, rtol=3e-2), "bf16 path mismatch"

    # 3) K-tiled reduction path (the large-H / v7x fallback), forced with a
    #    small K tile so it is exercised at these small shapes.
    run_kt = jax.jit(functools.partial(xlm_roberta_self_output, eps=eps,
                                       weight_k_tile=128))
    out_kt = run_kt(x2d, r2d, *params_bf16).reshape(batch, seq, hidden)
    jax.block_until_ready(out_kt)
    assert jnp.allclose(out_kt, ref, atol=3e-2, rtol=3e-2), "K-tiled path mismatch"

    print("KERNEL_OK")
</pallas_src>

<mosaic_0001>
module attributes {stable_mosaic.version = 11 : i64} {
  func.func @_self_output_kernel(%arg0: i32, %arg1: memref<16x256xf32, #tpu.memory_space<vmem>>, %arg2: memref<256x256xf32, #tpu.memory_space<vmem>>, %arg3: memref<1x256xf32, #tpu.memory_space<vmem>>, %arg4: memref<16x256xf32, #tpu.memory_space<vmem>>, %arg5: memref<1x256xf32, #tpu.memory_space<vmem>>, %arg6: memref<1x256xf32, #tpu.memory_space<vmem>>, %arg7: memref<16x256xf32, #tpu.memory_space<vmem>>) attributes {dimension_semantics = [#tpu.dimension_semantics<parallel>], iteration_bounds = array<i64: 1>, scalar_prefetch = 0 : i64, scratch_operands = 0 : i64, tpu.core_type = #tpu.core_type<tc>, window_params = [{transform_indices = @transform_0, window_bounds = array<i64: 16, 256>}, {pipeline_mode = #tpu.pipeline_mode<synchronous>, transform_indices = @transform_1, window_bounds = array<i64: 256, 256>}, {pipeline_mode = #tpu.pipeline_mode<synchronous>, transform_indices = @transform_2, window_bounds = array<i64: 1, 256>}, {transform_indices = @transform_3, window_bounds = array<i64: 16, 256>}, {pipeline_mode = #tpu.pipeline_mode<synchronous>, transform_indices = @transform_4, window_bounds = array<i64: 1, 256>}, {pipeline_mode = #tpu.pipeline_mode<synchronous>, transform_indices = @transform_5, window_bounds = array<i64: 1, 256>}, {transform_indices = @transform_6, window_bounds = array<i64: 16, 256>}]} {
    %c0 = arith.constant 0 : index
    %c0_0 = arith.constant 0 : index
    %0 = vector.load %arg1[%c0, %c0_0] : memref<16x256xf32, #tpu.memory_space<vmem>>, vector<16x256xf32>
    %c0_1 = arith.constant 0 : index
    %c0_2 = arith.constant 0 : index
    %1 = vector.load %arg2[%c0_1, %c0_2] : memref<256x256xf32, #tpu.memory_space<vmem>>, vector<256x256xf32>
    %cst = arith.constant dense<0.000000e+00> : vector<16x256xf32>
    %2 = tpu.matmul %0, %1, %cst {dimension_numbers = #tpu.dot_dimension_numbers<[1], [0], [0], [1], [0, 0, 1, 1], [], []>} : vector<16x256xf32>, vector<256x256xf32>, vector<16x256xf32> -> vector<16x256xf32>
    %c0_3 = arith.constant 0 : index
    %c0_4 = arith.constant 0 : index
    %3 = vector.load %arg4[%c0_3, %c0_4] : memref<16x256xf32, #tpu.memory_space<vmem>>, vector<16x256xf32>
    %4 = arith.addf %2, %3 : vector<16x256xf32>
    %c0_5 = arith.constant 0 : index
    %c0_6 = arith.constant 0 : index
    %5 = vector.load %arg3[%c0_5, %c0_6] : memref<1x256xf32, #tpu.memory_space<vmem>>, vector<1x256xf32>
    %6 = vector.broadcast %5 : vector<1x256xf32> to vector<16x256xf32>
    %7 = arith.addf %4, %6 : vector<16x256xf32>
    %c0_7 = arith.constant 0 : index
    %c0_8 = arith.constant 0 : index
    %8 = vector.load %arg5[%c0_7, %c0_8] : memref<1x256xf32, #tpu.memory_space<vmem>>, vector<1x256xf32>
    %c0_9 = arith.constant 0 : index
    %c0_10 = arith.constant 0 : index
    %9 = vector.load %arg6[%c0_9, %c0_10] : memref<1x256xf32, #tpu.memory_space<vmem>>, vector<1x256xf32>
    %cst_11 = arith.constant dense<0.000000e+00> : vector<16xf32>
    %10 = vector.multi_reduction <add>, %7, %cst_11 [1] : vector<16x256xf32> to vector<16xf32>
    %11 = vector.shape_cast %10 : vector<16xf32> to vector<16x1xf32>
    %cst_12 = arith.constant 2.560000e+02 : f32
    %12 = vector.broadcast %cst_12 : f32 to vector<16x1xf32>
    %13 = arith.divf %11, %12 : vector<16x1xf32>
    %14 = arith.mulf %7, %7 : vector<16x256xf32>
    %cst_13 = arith.constant dense<0.000000e+00> : vector<16xf32>
    %15 = vector.multi_reduction <add>, %14, %cst_13 [1] : vector<16x256xf32> to vector<16xf32>
    %16 = vector.shape_cast %15 : vector<16xf32> to vector<16x1xf32>
    %cst_14 = arith.constant 2.560000e+02 : f32
    %17 = vector.broadcast %cst_14 : f32 to vector<16x1xf32>
    %18 = arith.divf %16, %17 : vector<16x1xf32>
    %19 = arith.mulf %13, %13 : vector<16x1xf32>
    %20 = arith.subf %18, %19 : vector<16x1xf32>
    %cst_15 = arith.constant 0.000000e+00 : f32
    %21 = vector.broadcast %cst_15 : f32 to vector<16x1xf32>
    %22 = arith.maximumf %20, %21 : vector<16x1xf32>
    %cst_16 = arith.constant 9.99999974E-6 : f32
    %23 = vector.broadcast %cst_16 : f32 to vector<16x1xf32>
    %24 = arith.addf %22, %23 : vector<16x1xf32>
    %25 = math.rsqrt %24 : vector<16x1xf32>
    %26 = vector.broadcast %13 : vector<16x1xf32> to vector<16x256xf32>
    %27 = arith.subf %7, %26 : vector<16x256xf32>
    %28 = vector.broadcast %25 : vector<16x1xf32> to vector<16x256xf32>
    %29 = arith.mulf %27, %28 : vector<16x256xf32>
    %30 = vector.broadcast %8 : vector<1x256xf32> to vector<16x256xf32>
    %31 = arith.mulf %29, %30 : vector<16x256xf32>
    %32 = vector.broadcast %9 : vector<1x256xf32> to vector<16x256xf32>
    %33 = arith.addf %31, %32 : vector<16x256xf32>
    %c0_17 = arith.constant 0 : index
    %c0_18 = arith.constant 0 : index
    %34 = vector.load %arg7[%c0_17, %c0_18] : memref<16x256xf32, #tpu.memory_space<vmem>>, vector<16x256xf32>
    tpu.vector_store %arg7[%c0_17, %c0_18], %33 {strides = array<i32>} : memref<16x256xf32, #tpu.memory_space<vmem>>, vector<16x256xf32>,
    return
  }
  func.func @transform_0(%arg0: i32) -> (i32, i32) {
    %c0_i32 = arith.constant 0 : i32
    %c0_i32_0 = arith.constant 0 : i32
    return %arg0, %c0_i32 : i32, i32
  }
  func.func @transform_1(%arg0: i32) -> (i32, i32) {
    %c0_i32 = arith.constant 0 : i32
    %c0_i32_0 = arith.constant 0 : i32
    %c0_i32_1 = arith.constant 0 : i32
    return %c0_i32, %c0_i32_0 : i32, i32
  }
  func.func @transform_2(%arg0: i32) -> (i32, i32) {
    %c0_i32 = arith.constant 0 : i32
    %c0_i32_0 = arith.constant 0 : i32
    %c0_i32_1 = arith.constant 0 : i32
    return %c0_i32, %c0_i32_0 : i32, i32
  }
  func.func @transform_3(%arg0: i32) -> (i32, i32) {
    %c0_i32 = arith.constant 0 : i32
    %c0_i32_0 = arith.constant 0 : i32
    return %arg0, %c0_i32 : i32, i32
  }
  func.func @transform_4(%arg0: i32) -> (i32, i32) {
    %c0_i32 = arith.constant 0 : i32
    %c0_i32_0 = arith.constant 0 : i32
    %c0_i32_1 = arith.constant 0 : i32
    return %c0_i32, %c0_i32_0 : i32, i32
  }
  func.func @transform_5(%arg0: i32) -> (i32, i32) {
    %c0_i32 = arith.constant 0 : i32
    %c0_i32_0 = arith.constant 0 : i32
    %c0_i32_1 = arith.constant 0 : i32
    return %c0_i32, %c0_i32_0 : i32, i32
  }
  func.func @transform_6(%arg0: i32) -> (i32, i32) {
    %c0_i32 = arith.constant 0 : i32
    %c0_i32_0 = arith.constant 0 : i32
    return %arg0, %c0_i32 : i32, i32
  }
}

</mosaic_0001>

<llo_original>
// kernel: xlm_roberta_self_output.1
$region0: #{xlm_roberta_self_output.1}
  #allocation0 [shape = 'u32[]', space=smem, size = 0x4, offset = 0x4, fixed_abs, tag = 'smem constant byte address 0x4 - core index']
  #allocation1 [shape = 'u32[144,128]{1,0:T(1,128)}', space=vmem, size = 0x12000, scoped, tag = 'internal scratch']
  %s0 = inlined_call_operand.hbm [shape: f32[16,256], index: 0, kind: input, shape index: {}]
  %s1 = inlined_call_operand.hbm [shape: f32[256,256], index: 1, kind: input, shape index: {}]
  %s2 = inlined_call_operand.vmem [shape: f32[1,256], index: 2, kind: input, shape index: {}]
  %s3 = inlined_call_operand.hbm [shape: f32[16,256], index: 3, kind: input, shape index: {}]
  %s4 = inlined_call_operand.vmem [shape: f32[1,256], index: 4, kind: input, shape index: {}]
  %s5 = inlined_call_operand.vmem [shape: f32[1,256], index: 5, kind: input, shape index: {}]
  %s6 = inlined_call_operand.hbm [shape: f32[16,256], index: 6, kind: output, shape index: {}]
  %s7 = sld [smem:[#allocation0]]
  $region46: #{xlm_roberta_self_output.1} parent=0
    _
  %s9 = ssub.s32 1, %s7
  %s10 = scalar_select 0, %s9, %s7
  $region1: #{xlm_roberta_self_output.1} parent=0
    #allocation2 [shape = 'u8[16384]{0}', space=vmem, size = 0x4000, scoped, tag = 'input window, operand 0, single buffered']
    #allocation3 [shape = 's32[1]{0}', space=sflag, size = 0x4, scoped, tag = 'scoped memory for xlm_roberta_self_output.1']
    #allocation4 [shape = 's32[1]{0}', space=sflag, size = 0x4, scoped, tag = 'scoped memory for xlm_roberta_self_output.1']
    #allocation5 [shape = 'u8[262144]{0}', space=vmem, size = 0x40000, scoped, tag = 'input window, operand 1, single buffered']
    #allocation6 [shape = 's32[1]{0}', space=sflag, size = 0x4, scoped, tag = 'scoped memory for xlm_roberta_self_output.1']
    #allocation7 [shape = 'u8[16384]{0}', space=vmem, size = 0x4000, scoped, tag = 'input window, operand 3, single buffered']
    #allocation8 [shape = 'u8[16384]{0}', space=vmem, size = 0x4000, scoped, tag = 'output window, operand 0, single buffered']
    %11 = vsyncpa [#allocation3], 0
    %12 = vsyncpa [#allocation6], 0
    %13 = vsyncpa [#allocation4], 0
    // Predicated region
    $region2: #{xlm_roberta_self_output.1} parent=1 // pred_check
      _
    $region3: #{xlm_roberta_self_output.1} parent=1 // pred_check_branch
      %15 = sbr.rel (0) target = $region5
    $region4: #{xlm_roberta_self_output.1} parent=1 // pred_region
      %s17 = ssub.s32 512, 512
      %18 = vsyncadd [#allocation3], %s17
      %s19 = sshll.u32 [#allocation2], 4
      %s20 = int_to_ptr.vmem [resolvable:$true] %s19
      %25 = dma.hbm_to_vmem [thread:$0]  %s0, 512, %s20, [#allocation3], 256, 256, 16
    $region5: #{xlm_roberta_self_output.1} parent=1 // pred_fallthru
      _
    // Predicated region
    $region6: #{xlm_roberta_self_output.1} parent=1 // pred_check
      _
    $region7: #{xlm_roberta_self_output.1} parent=1 // pred_check_branch
      %27 = sbr.rel (0) target = $region9
    $region8: #{xlm_roberta_self_output.1} parent=1 // pred_region
      %s29 = ssub.s32 8192, 8192
      %30 = vsyncadd [#allocation6], %s29
      %s31 = sshll.u32 [#allocation5], 4
      %s32 = int_to_ptr.vmem [resolvable:$true] %s31
      %37 = dma.hbm_to_vmem [thread:$0]  %s1, 8192, %s32, [#allocation6], 256, 256, 16
    $region9: #{xlm_roberta_self_output.1} parent=1 // pred_fallthru
      _
    // Predicated region
    $region10: #{xlm_roberta_self_output.1} parent=1 // pred_check
      _
    $region11: #{xlm_roberta_self_output.1} parent=1 // pred_check_branch
      %39 = sbr.rel (0) target = $region13
    $region12: #{xlm_roberta_self_output.1} parent=1 // pred_region
      _
    $region13: #{xlm_roberta_self_output.1} parent=1 // pred_fallthru
      _
    // Predicated region
    $region14: #{xlm_roberta_self_output.1} parent=1 // pred_check
      _
    $region15: #{xlm_roberta_self_output.1} parent=1 // pred_check_branch
      %41 = sbr.rel (0) target = $region17
    $region16: #{xlm_roberta_self_output.1} parent=1 // pred_region
      %s43 = ssub.s32 512, 512
      %44 = vsyncadd [#allocation6], %s43
      %s45 = sshll.u32 [#allocation7], 4
      %s46 = int_to_ptr.vmem [resolvable:$true] %s45
      %51 = dma.hbm_to_vmem [thread:$0]  %s3, 512, %s46, [#allocation6], 256, 256, 16
    $region17: #{xlm_roberta_self_output.1} parent=1 // pred_fallthru
      _
    // Predicated region
    $region18: #{xlm_roberta_self_output.1} parent=1 // pred_check
      _
    $region19: #{xlm_roberta_self_output.1} parent=1 // pred_check_branch
      %53 = sbr.rel (0) target = $region21
    $region20: #{xlm_roberta_self_output.1} parent=1 // pred_region
      _
    $region21: #{xlm_roberta_self_output.1} parent=1 // pred_fallthru
      _
    // Predicated region
    $region22: #{xlm_roberta_self_output.1} parent=1 // pred_check
      _
    $region23: #{xlm_roberta_self_output.1} parent=1 // pred_check_branch
      %55 = sbr.rel (0) target = $region25
    $region24: #{xlm_roberta_self_output.1} parent=1 // pred_region
      _
    $region25: #{xlm_roberta_self_output.1} parent=1 // pred_fallthru
      _
    // Predicated region
    $region26: #{xlm_roberta_self_output.1} parent=1 // pred_check
      _
    $region27: #{xlm_roberta_self_output.1} parent=1 // pred_check_branch
      %57 = sbr.rel (0) target = $region29
    $region28: #{xlm_roberta_self_output.1} parent=1 // pred_region
      %58 = dma.done [#allocation3], 512
    $region29: #{xlm_roberta_self_output.1} parent=1 // pred_fallthru
      _
    // Predicated region
    $region30: #{xlm_roberta_self_output.1} parent=1 // pred_check
      _
    $region31: #{xlm_roberta_self_output.1} parent=1 // pred_check_branch
      %60 = sbr.rel (0) target = $region33
    $region32: #{xlm_roberta_self_output.1} parent=1 // pred_region
      %61 = dma.done [#allocation6], 8192
    $region33: #{xlm_roberta_self_output.1} parent=1 // pred_fallthru
      _
    // Predicated region
    $region34: #{xlm_roberta_self_output.1} parent=1 // pred_check
      _
    $region35: #{xlm_roberta_self_output.1} parent=1 // pred_check_branch
      %63 = sbr.rel (0) target = $region37
    $region36: #{xlm_roberta_self_output.1} parent=1 // pred_region
      %64 = dma.done [#allocation6], 512
    $region37: #{xlm_roberta_self_output.1} parent=1 // pred_fallthru
      _
    %v65 = vld [vmem:[#allocation2] sm:$0xff]
    %v66 = vld [vmem:[#allocation2 + $0x8] sm:$0xff]
    %v67 = vld [vmem:[#allocation2 + $0x10] sm:$0xff]
    %v68 = vld [vmem:[#allocation2 + $0x18] sm:$0xff]
    %v69 = vld [vmem:[#allocation5] sm:$0xff]
    %v70 = vld [vmem:[#allocation5 + $0x8] sm:$0xff]
    %v71 = vld [vmem:[#allocation5 + $0x10] sm:$0xff]
    %v72 = vld [vmem:[#allocation5 + $0x18] sm:$0xff]
    %v73 = vld [vmem:[#allocation5 + $0x20] sm:$0xff]
    %v74 = vld [vmem:[#allocation5 + $0x28] sm:$0xff]
    %v75 = vld [vmem:[#allocation5 + $0x30] sm:$0xff]
    %v76 = vld [vmem:[#allocation5 + $0x38] sm:$0xff]
    %v77 = vld [vmem:[#allocation5 + $0x40] sm:$0xff]
    %v78 = vld [vmem:[#allocation5 + $0x48] sm:$0xff]
    %v79 = vld [vmem:[#allocation5 + $0x50] sm:$0xff]
    %v80 = vld [vmem:[#allocation5 + $0x58] sm:$0xff]
    %v81 = vld [vmem:[#allocation5 + $0x60] sm:$0xff]
    %v82 = vld [vmem:[#allocation5 + $0x68] sm:$0xff]
    %v83 = vld [vmem:[#allocation5 + $0x70] sm:$0xff]
    %v84 = vld [vmem:[#allocation5 + $0x78] sm:$0xff]
    %v85 = vld [vmem:[#allocation5 + $0x80] sm:$0xff]
    %v86 = vld [vmem:[#allocation5 + $0x88] sm:$0xff]
    %v87 = vld [vmem:[#allocation5 + $0x90] sm:$0xff]
    %v88 = vld [vmem:[#allocation5 + $0x98] sm:$0xff]
    %v89 = vld [vmem:[#allocation5 + $0xa0] sm:$0xff]
    %v90 = vld [vmem:[#allocation5 + $0xa8] sm:$0xff]
    %v91 = vld [vmem:[#allocation5 + $0xb0] sm:$0xff]
    %v92 = vld [vmem:[#allocation5 + $0xb8] sm:$0xff]
    %v93 = vld [vmem:[#allocation5 + $0xc0] sm:$0xff]
    %v94 = vld [vmem:[#allocation5 + $0xc8] sm:$0xff]
    %v95 = vld [vmem:[#allocation5 + $0xd0] sm:$0xff]
    %v96 = vld [vmem:[#allocation5 + $0xd8] sm:$0xff]
    %v97 = vld [vmem:[#allocation5 + $0xe0] sm:$0xff]
    %v98 = vld [vmem:[#allocation5 + $0xe8] sm:$0xff]
    %v99 = vld [vmem:[#allocation5 + $0xf0] sm:$0xff]
    %v100 = vld [vmem:[#allocation5 + $0xf8] sm:$0xff]
    %v101 = vld [vmem:[#allocation5 + $0x100] sm:$0xff]
    %v102 = vld [vmem:[#allocation5 + $0x108] sm:$0xff]
    %v103 = vld [vmem:[#allocation5 + $0x110] sm:$0xff]
    %v104 = vld [vmem:[#allocation5 + $0x118] sm:$0xff]
    %v105 = vld [vmem:[#allocation5 + $0x120] sm:$0xff]
    %v106 = vld [vmem:[#allocation5 + $0x128] sm:$0xff]
    %v107 = vld [vmem:[#allocation5 + $0x130] sm:$0xff]
    %v108 = vld [vmem:[#allocation5 + $0x138] sm:$0xff]
    %v109 = vld [vmem:[#allocation5 + $0x140] sm:$0xff]
    %v110 = vld [vmem:[#allocation5 + $0x148] sm:$0xff]
    %v111 = vld [vmem:[#allocation5 + $0x150] sm:$0xff]
    %v112 = vld [vmem:[#allocation5 + $0x158] sm:$0xff]
    %v113 = vld [vmem:[#allocation5 + $0x160] sm:$0xff]
    %v114 = vld [vmem:[#allocation5 + $0x168] sm:$0xff]
    %v115 = vld [vmem:[#allocation5 + $0x170] sm:$0xff]
    %v116 = vld [vmem:[#allocation5 + $0x178] sm:$0xff]
    %v117 = vld [vmem:[#allocation5 + $0x180] sm:$0xff]
    %v118 = vld [vmem:[#allocation5 + $0x188] sm:$0xff]
    %v119 = vld [vmem:[#allocation5 + $0x190] sm:$0xff]
    %v120 = vld [vmem:[#allocation5 + $0x198] sm:$0xff]
    %v121 = vld [vmem:[#allocation5 + $0x1a0] sm:$0xff]
    %v122 = vld [vmem:[#allocation5 + $0x1a8] sm:$0xff]
    %v123 = vld [vmem:[#allocation5 + $0x1b0] sm:$0xff]
    %v124 = vld [vmem:[#allocation5 + $0x1b8] sm:$0xff]
    %v125 = vld [vmem:[#allocation5 + $0x1c0] sm:$0xff]
    %v126 = vld [vmem:[#allocation5 + $0x1c8] sm:$0xff]
    %v127 = vld [vmem:[#allocation5 + $0x1d0] sm:$0xff]
    %v128 = vld [vmem:[#allocation5 + $0x1d8] sm:$0xff]
    %v129 = vld [vmem:[#allocation5 + $0x1e0] sm:$0xff]
    %v130 = vld [vmem:[#allocation5 + $0x1e8] sm:$0xff]
    %v131 = vld [vmem:[#allocation5 + $0x1f0] sm:$0xff]
    %v132 = vld [vmem:[#allocation5 + $0x1f8] sm:$0xff]
    %v133 = vld [vmem:[#allocation7] sm:$0xff]
    %v134 = vld [vmem:[#allocation7 + $0x8] sm:$0xff]
    %v135 = vld [vmem:[#allocation7 + $0x10] sm:$0xff]
    %v136 = vld [vmem:[#allocation7 + $0x18] sm:$0xff]
    %137 = vmatprep.subr.mxu0 %v70
    %138 = vmatpush1.msra.mxu0 %v69
    %139 = vmatprep.subr.mxu0 %v72
    %140 = vmatpush1.msra.mxu0 %v71
    %141 = vmatprep.subr.mxu0 %v74
    %142 = vmatpush1.msra.mxu0 %v73
    %143 = vmatprep.subr.mxu0 %v76
    %144 = vmatpush1.msra.mxu0 %v75
    %145 = vmatprep.subr.mxu0 %v78
    %146 = vmatpush1.msra.mxu0 %v77
    %147 = vmatprep.subr.mxu0 %v80
    %148 = vmatpush1.msra.mxu0 %v79
    %149 = vmatprep.subr.mxu0 %v82
    %150 = vmatpush1.msra.mxu0 %v81
    %151 = vmatprep.subr.mxu0 %v84
    %152 = vmatpush1.msra.mxu0 %v83
    %153 = vmatprep.subr.mxu0 %v86
    %154 = vmatpush1.msra.mxu0 %v85
    %155 = vmatprep.subr.mxu0 %v88
    %156 = vmatpush1.msra.mxu0 %v87
    %157 = vmatprep.subr.mxu0 %v90
    %158 = vmatpush1.msra.mxu0 %v89
    %159 = vmatprep.subr.mxu0 %v92
    %160 = vmatpush1.msra.mxu0 %v91
    %161 = vmatprep.subr.mxu0 %v94
    %162 = vmatpush1.msra.mxu0 %v93
    %163 = vmatprep.subr.mxu0 %v96
    %164 = vmatpush1.msra.mxu0 %v95
    %165 = vmatprep.subr.mxu0 %v98
    %166 = vmatpush1.msra.mxu0 %v97
    %167 = vmatprep.subr.mxu0 %v100
    %168 = vmatpush1.msra.mxu0 %v99
    %169 = vmatprep.subr.mxu0 %v102
    %170 = vmatpush1.msra.mxu0 %v101
    %171 = vmatprep.subr.mxu0 %v104
    %172 = vmatpush1.msra.mxu0 %v103
    %173 = vmatprep.subr.mxu0 %v106
    %174 = vmatpush1.msra.mxu0 %v105
    %175 = vmatprep.subr.mxu0 %v108
    %176 = vmatpush1.msra.mxu0 %v107
    %177 = vmatprep.subr.mxu0 %v110
    %178 = vmatpush1.msra.mxu0 %v109
    %179 = vmatprep.subr.mxu0 %v112
    %180 = vmatpush1.msra.mxu0 %v111
    %181 = vmatprep.subr.mxu0 %v114
    %182 = vmatpush1.msra.mxu0 %v113
    %183 = vmatprep.subr.mxu0 %v116
    %184 = vmatpush1.msra.mxu0 %v115
    %185 = vmatprep.subr.mxu0 %v118
    %186 = vmatpush1.msra.mxu0 %v117
    %187 = vmatprep.subr.mxu0 %v120
    %188 = vmatpush1.msra.mxu0 %v119
    %189 = vmatprep.subr.mxu0 %v122
    %190 = vmatpush1.msra.mxu0 %v121
    %191 = vmatprep.subr.mxu0 %v124
    %192 = vmatpush1.msra.mxu0 %v123
    %193 = vmatprep.subr.mxu0 %v126
    %194 = vmatpush1.msra.mxu0 %v125
    %195 = vmatprep.subr.mxu0 %v128
    %196 = vmatpush1.msra.mxu0 %v127
    %197 = vmatprep.subr.mxu0 %v130
    %198 = vmatpush1.msra.mxu0 %v129
    %199 = vmatprep.subr.mxu0 %v132
    %200 = vmatpush1.msra.mxu0 %v131
    %201 = vmatprep.mubr.f32.mxu0 %v66
    %202 = vmatmul.mubr.f32.gmra.mrb[0].mxu0 %v65
    %v203 = vpop.f32.mrb[0].mxu0
    %v204 = vadd.f32 %v133, %v203
    %v205 = vpop.f32.mrb[0].mxu0
    %v206 = vadd.f32 %v134, %v205
    %207 = vmatprep.mubr.f32.mxu0 %v68
    %208 = vmatmul.mubr.f32.gmra.mrb[0].mxu0 %v67
    %v209 = vpop.f32.mrb[0].mxu0
    %v210 = vadd.f32 %v135, %v209
    %v211 = vpop.f32.mrb[0].mxu0
    %v212 = vadd.f32 %v136, %v211
    %213 = vdwg.mxu0
    %v214 = vld [vmem:[%s2] sm:$0x3]
    %v216 = vlaneseq
    %v217 = vshrl.u32 %v216, 7
    %v218 = vsub.s32 0, %v217
    %v219 = vrot.slane %v214, %v218
    %v220 = vlaneseq
    %v221 = vshrl.u32 %v220, 7
    %v222 = vsub.s32 1, %v221
    %v223 = vrot.slane %v214, %v222
    %v226 = vadd.f32 %v204, %v219
    %v227 = vadd.f32 %v206, %v223
    %v228 = vadd.f32 %v210, %v219
    %v229 = vadd.f32 %v212, %v223
    %v230 = vld [vmem:[%s4] sm:$0x3]
    %v231 = vld [vmem:[%s5] sm:$0x3]
    %v232 = vadd.f32 %v226, %v227
    %233 = vadd.xlane.f32.xlu0 %v232
    %v234 = vpop.xlane.xlu0 %233
    %v235 = vadd.f32 %v228, %v229
    %236 = vadd.xlane.f32.xlu0 %v235
    %v237 = vpop.xlane.xlu0 %236
    %v238 = vrcp.pop 256.0
    %v239 = vmul.f32 %v234, %v238
    %v240 = vmul.f32 %v237, %v238
    %v241 = vmul.f32 %v226, %v226
    %v242 = vmul.f32 %v227, %v227
    %v243 = vmul.f32 %v228, %v228
    %v244 = vmul.f32 %v229, %v229
    %v245 = vadd.f32 %v241, %v242
    %246 = vadd.xlane.f32.xlu0 %v245
    %v247 = vpop.xlane.xlu0 %246
    %v248 = vadd.f32 %v243, %v244
    %249 = vadd.xlane.f32.xlu0 %v248
    %v250 = vpop.xlane.xlu0 %249
    %v251 = vmul.f32 %v247, %v238
    %v252 = vmul.f32 %v250, %v238
    %v253 = vmul.f32 %v239, %v239
    %v254 = vmul.f32 %v240, %v240
    %v255 = vsub.f32 %v251, %v253
    %v256 = vsub.f32 %v252, %v254
    %v257 = vmax.f32 %v255, 0.0
    %v258 = vmax.f32 %v256, 0.0
    %v259 = vadd.f32 %v257, 1e-05
    %v260 = vadd.f32 %v258, 1e-05
    %v261 = vrsqrt.pop %v259
    %v262 = vrsqrt.pop %v260
    %v263 = vsub.f32 %v226, %v239
    %v264 = vsub.f32 %v227, %v239
    %v265 = vsub.f32 %v228, %v240
    %v266 = vsub.f32 %v229, %v240
    %v267 = vmul.f32 %v263, %v261
    %v268 = vmul.f32 %v264, %v261
    %v269 = vmul.f32 %v265, %v262
    %v270 = vmul.f32 %v266, %v262
    %v272 = vlaneseq
    %v273 = vshrl.u32 %v272, 7
    %v274 = vsub.s32 0, %v273
    %v275 = vrot.slane %v230, %v274
    %v276 = vlaneseq
    %v277 = vshrl.u32 %v276, 7
    %v278 = vsub.s32 1, %v277
    %v279 = vrot.slane %v230, %v278
    %v282 = vmul.f32 %v267, %v275
    %v283 = vmul.f32 %v268, %v279
    %v284 = vmul.f32 %v269, %v275
    %v285 = vmul.f32 %v270, %v279
    %v287 = vlaneseq
    %v288 = vshrl.u32 %v287, 7
    %v289 = vsub.s32 0, %v288
    %v290 = vrot.slane %v231, %v289
    %v291 = vlaneseq
    %v292 = vshrl.u32 %v291, 7
    %v293 = vsub.s32 1, %v292
    %v294 = vrot.slane %v231, %v293
    %v297 = vadd.f32 %v282, %v290
    %v298 = vadd.f32 %v283, %v294
    %v299 = vadd.f32 %v284, %v290
    %v300 = vadd.f32 %v285, %v294
    %301 = vst [vmem:[#allocation8] sm:$0xff] %v297
    %302 = vst [vmem:[#allocation8 + $0x8] sm:$0xff] %v298
    %303 = vst [vmem:[#allocation8 + $0x10] sm:$0xff] %v299
    %304 = vst [vmem:[#allocation8 + $0x18] sm:$0xff] %v300
    // Predicated region
    $region38: #{xlm_roberta_self_output.1} parent=1 // pred_check
      _
    $region39: #{xlm_roberta_self_output.1} parent=1 // pred_check_branch
      %306 = sbr.rel (0) target = $region41
    $region40: #{xlm_roberta_self_output.1} parent=1 // pred_region
      %s308 = ssub.s32 512, 512
      %309 = vsyncadd [#allocation4], %s308
      %s310 = sshll.u32 [#allocation8], 4
      %s311 = int_to_ptr.vmem [resolvable:$true] %s310
      %316 = dma.vmem_to_hbm [thread:$0]  %s311, 512, %s6, [#allocation4], 256, 256, 16
    $region41: #{xlm_roberta_self_output.1} parent=1 // pred_fallthru
      _
    // Predicated region
    $region42: #{xlm_roberta_self_output.1} parent=1 // pred_check
      _
    $region43: #{xlm_roberta_self_output.1} parent=1 // pred_check_branch
      %318 = sbr.rel (0) target = $region45
    $region44: #{xlm_roberta_self_output.1} parent=1 // pred_region
      %319 = dma.done [#allocation4], 512
    $region45: #{xlm_roberta_self_output.1} parent=1 // pred_fallthru
      _
    %320 = vsyncpa [#allocation3], 1
    %321 = vsyncpa [#allocation6], 1
    %322 = vsyncpa [#allocation4], 1

</llo_original>
